<compile_context>
chip_gen: v7x
topology: tpu7x:2x2x1
jax: 0.10.0
libtpu: 0.0.40
codegen_flags: <defaults>
</compile_context>

<pallas_src>
import functools

import jax
import jax.numpy as jnp
import numpy as np
from jax.experimental import pallas as pl
from jax.experimental.pallas import tpu as pltpu


def _tv_partial_kernel(x_ref, h_ref, w_ref, *, H, W):
    """One grid step: partial squared-diff sums for a (TBC, H*W) slab.

    x_ref : (TBC, H*W) block of row-major-flattened images.
    h_ref : (1, 8, 128) output tile, filled with this block's sum of squared
            height-diffs (scalar broadcast over the tile).
    w_ref : (1, 8, 128) output tile, same for width-diffs.
    """
    x = x_ref[...]
    if x.dtype != jnp.float32:
        x = x.astype(jnp.float32)  # only cast when needed (free for f32 inputs)
    tbc, hw = x.shape

    lane = jax.lax.broadcasted_iota(jnp.int32, (tbc, hw), 1)

    # Height diff: pixel (i, j) has flat index k = i*W + j; the pixel below is
    # k + W. roll by (hw - W) == roll by -W: result[k] = x[(k + W) % hw].
    # Valid only for rows i < H-1, i.e. k < (H-1)*W.
    x_down = pltpu.roll(x, shift=hw - W, axis=1)
    dh = jnp.where(lane < (H - 1) * W, x_down - x, 0.0)

    # Width diff: right neighbour is k + 1; invalid on the last column
    # (j == W-1, which also covers the roll wrap-around at k == hw-1).
    x_right = pltpu.roll(x, shift=hw - 1, axis=1)
    dw = jnp.where(lane % W != W - 1, x_right - x, 0.0)

    h_ref[...] = jnp.full((1, 8, 128), jnp.sum(dh * dh), dtype=jnp.float32)
    w_ref[...] = jnp.full((1, 8, 128), jnp.sum(dw * dw), dtype=jnp.float32)


def tv_sums(x4d):
    """x4d: (B, C, H, W). Returns (sum of squared h-diffs, sum of squared w-diffs)."""
    B, C, H, W = x4d.shape
    BC, HW = B * C, H * W
    x = x4d.reshape(BC, HW)

    # Rows per block: multiple of 8 sublanes, ~1 MiB of f32 per block (safe under
    # v5e's 16 MiB scoped VMEM and v7x's 64 MiB physical VMEM), and never padded
    # far beyond the actual number of rows.
    # TODO(synk): for very large images (H*W*32B > ~1 MiB) also tile along H.
    bytes_per_row = HW * 4
    tbc = max(8, min((1 << 20) // bytes_per_row, pl.cdiv(BC, 8) * 8))
    tbc = max(8, (tbc // 8) * 8)

    bc_pad = pl.cdiv(BC, tbc) * tbc
    if bc_pad != BC:
        # Zero-padded rows contribute exactly 0 to both sums (all diffs are 0).
        x = jnp.pad(x, ((0, bc_pad - BC), (0, 0)))
    num_blocks = bc_pad // tbc

    kernel = functools.partial(_tv_partial_kernel, H=H, W=W)
    h_p, w_p = pl.pallas_call(
        kernel,
        out_shape=(jax.ShapeDtypeStruct((num_blocks, 8, 128), jnp.float32),
                   jax.ShapeDtypeStruct((num_blocks, 8, 128), jnp.float32)),
        grid_spec=pltpu.PrefetchScalarGridSpec(
            num_scalar_prefetch=0,
            grid=(num_blocks,),
            in_specs=[pl.BlockSpec((tbc, HW), lambda i: (i, 0))],
            out_specs=(pl.BlockSpec((1, 8, 128), lambda i: (i, 0, 0)),
                       pl.BlockSpec((1, 8, 128), lambda i: (i, 0, 0))),
        ),
        compiler_params=pltpu.CompilerParams(
            dimension_semantics=("parallel",),   # blocks are independent
            vmem_limit_bytes=32 * 1024 * 1024,
        ),
    )(x)
    # Tiny final reduction over per-block partials (each tile holds one scalar).
    return jnp.sum(h_p[:, 0, 0]), jnp.sum(w_p[:, 0, 0])


class TVPallas:
    """Total Variation, matching the PyTorch `TV` module semantics."""

    def __init__(self, orig_image=None):
        # orig_image: (C, H, W) array or None (same as the torch module).
        if orig_image is not None:
            self.img = jnp.asarray(orig_image)[None]          # (1, C, H, W)
            g_img = jnp.mean(self.img, axis=1)                # (1, H, W), channel mean
            # Constant per instance: hoist the image-TV kernel out of __call__.
            h_i, w_i = tv_sums(g_img[:, None])                # reuse kernel on (1,1,H,W)
            self._h_tv_img = jax.block_until_ready(h_i)
            self._w_tv_img = jax.block_until_ready(w_i)
        else:
            self.img = None

    def __call__(self, x):
        B, C, H, W = x.shape
        count_h = C * (H - 1) * W
        count_w = C * H * (W - 1)

        h_tv, w_tv = tv_sums(x)

        loss_weight = jnp.float32(1.0)
        if self.img is not None:
            gamma = 5.0
            deriv_img = (jnp.abs(self._h_tv_img / count_h)
                         + jnp.abs(self._w_tv_img / count_w)) / B
            loss_weight = jnp.exp(-gamma * deriv_img) / 2.0

        return loss_weight * 2.0 * (h_tv / count_h + w_tv / count_w) / B


def tv_ref(x, orig_image=None):
    """Pure-JAX reference replicating the PyTorch forward exactly."""
    B, C, H, W = x.shape
    count_h = C * (H - 1) * W
    count_w = C * H * (W - 1)
    h_tv = jnp.sum((x[:, :, 1:, :] - x[:, :, :-1, :]) ** 2)
    w_tv = jnp.sum((x[:, :, :, 1:] - x[:, :, :, :-1]) ** 2)
    lw = 1.0
    if orig_image is not None:
        g = jnp.mean(orig_image[None], axis=1)
        h_i = jnp.sum((g[:, 1:, :] - g[:, :-1, :]) ** 2)
        w_i = jnp.sum((g[:, :, 1:] - g[:, :, :-1]) ** 2)
        d = (jnp.abs(h_i / count_h) + jnp.abs(w_i / count_w)) / B
        lw = jnp.exp(-5.0 * d) / 2.0
    return lw * 2.0 * (h_tv / count_h + w_tv / count_w) / B


if __name__ == "__main__":
    key = jax.random.PRNGKey(0)
    kx, kimg = jax.random.split(key)
    x = jax.random.normal(kx, (2, 4, 16, 16), dtype=jnp.float32)          # (B, C, H, W)
    orig_image = jax.random.normal(kimg, (4, 16, 16), dtype=jnp.float32)  # (C, H, W)

    # Unweighted TV (orig_image=None)
    tv_plain = TVPallas(orig_image=None)
    out_plain = jax.block_until_ready(tv_plain(x))
    ref_plain = jax.block_until_ready(tv_ref(x, None))

    # Image-weighted TV
    tv_weighted = TVPallas(orig_image=orig_image)
    out_weighted = jax.block_until_ready(tv_weighted(x))
    ref_weighted = jax.block_until_ready(tv_ref(x, orig_image))

    assert np.allclose(np.asarray(out_plain), np.asarray(ref_plain), rtol=1e-5, atol=1e-5)
    assert np.allclose(np.asarray(out_weighted), np.asarray(ref_weighted), rtol=1e-5, atol=1e-5)

    print("KERNEL_OK")
</pallas_src>

<mosaic_0001>
module attributes {stable_mosaic.version = 11 : i64} {
  func.func @_tv_partial_kernel(%arg0: i32, %arg1: memref<8x256xf32, #tpu.memory_space<vmem>>, %arg2: memref<1x8x128xf32, #tpu.memory_space<vmem>>, %arg3: memref<1x8x128xf32, #tpu.memory_space<vmem>>) attributes {dimension_semantics = [#tpu.dimension_semantics<parallel>], iteration_bounds = array<i64: 1>, scalar_prefetch = 0 : i64, scratch_operands = 0 : i64, tpu.core_type = #tpu.core_type<tc>, window_params = [{transform_indices = @transform_0, window_bounds = array<i64: 8, 256>}, {transform_indices = @transform_1, window_bounds = array<i64: 1, 8, 128>}, {transform_indices = @transform_2, window_bounds = array<i64: 1, 8, 128>}]} {
    %c0 = arith.constant 0 : index
    %c0_0 = arith.constant 0 : index
    %0 = vector.load %arg1[%c0, %c0_0] : memref<8x256xf32, #tpu.memory_space<vmem>>, vector<8x256xf32>
    %1 = tpu.iota {dimensions = array<i32: 1>} : vector<8x256xi32>
    %c240_i32 = arith.constant 240 : i32
    %2 = tpu.dynamic_rotate %0 by %c240_i32 dim 1 : vector<8x256xf32>, i32 -> vector<8x256xf32>
    %c240_i32_1 = arith.constant 240 : i32
    %3 = vector.broadcast %c240_i32_1 : i32 to vector<8x256xi32>
    %4 = arith.cmpi slt, %1, %3 : vector<8x256xi32>
    %5 = arith.subf %2, %0 : vector<8x256xf32>
    %cst = arith.constant 0.000000e+00 : f32
    %6 = vector.broadcast %cst : f32 to vector<8x256xf32>
    %7 = arith.select %4, %5, %6 : vector<8x256xi1>, vector<8x256xf32>
    %c255_i32 = arith.constant 255 : i32
    %8 = tpu.dynamic_rotate %0 by %c255_i32 dim 1 : vector<8x256xf32>, i32 -> vector<8x256xf32>
    %c16_i32 = arith.constant 16 : i32
    %c0_i32 = arith.constant 0 : i32
    %9 = arith.cmpi eq, %c16_i32, %c0_i32 : i32
    %c1_i32 = arith.constant 1 : i32
    %10 = arith.select %9, %c1_i32, %c16_i32 : i32
    %11 = vector.broadcast %10 : i32 to vector<8x256xi32>
    %12 = arith.remsi %1, %11 : vector<8x256xi32>
    %c0_i32_2 = arith.constant 0 : i32
    %13 = vector.broadcast %c0_i32_2 : i32 to vector<8x256xi32>
    %14 = arith.cmpi ne, %12, %13 : vector<8x256xi32>
    %c0_i32_3 = arith.constant 0 : i32
    %15 = vector.broadcast %c0_i32_3 : i32 to vector<8x256xi32>
    %16 = arith.cmpi slt, %12, %15 : vector<8x256xi32>
    %c0_i32_4 = arith.constant 0 : i32
    %17 = arith.cmpi slt, %10, %c0_i32_4 : i32
    %18 = vector.broadcast %17 : i1 to vector<8x256xi1>
    %19 = vector.broadcast %18 : vector<8x256xi1> to vector<8x256xi1>
    %20 = arith.xori %16, %19 : vector<8x256xi1>
    %21 = arith.andi %20, %14 : vector<8x256xi1>
    %22 = vector.broadcast %10 : i32 to vector<8x256xi32>
    %23 = arith.addi %12, %22 : vector<8x256xi32>
    %24 = arith.select %21, %23, %12 : vector<8x256xi1>, vector<8x256xi32>
    %c15_i32 = arith.constant 15 : i32
    %25 = vector.broadcast %c15_i32 : i32 to vector<8x256xi32>
    %26 = arith.cmpi ne, %24, %25 : vector<8x256xi32>
    %27 = arith.subf %8, %0 : vector<8x256xf32>
    %cst_5 = arith.constant 0.000000e+00 : f32
    %28 = vector.broadcast %cst_5 : f32 to vector<8x256xf32>
    %29 = arith.select %26, %27, %28 : vector<8x256xi1>, vector<8x256xf32>
    %30 = arith.mulf %7, %7 : vector<8x256xf32>
    %31 = vector.shape_cast %30 : vector<8x256xf32> to vector<1x8x256xf32>
    %cst_6 = arith.constant dense<0.000000e+00> : vector<1xf32>
    %32 = vector.multi_reduction <add>, %31, %cst_6 [1, 2] : vector<1x8x256xf32> to vector<1xf32>
    %33 = vector.shape_cast %32 : vector<1xf32> to vector<1x1x1xf32>
    %34 = vector.extract %33[0, 0, 0] : f32 from vector<1x1x1xf32>
    %35 = vector.broadcast %34 : f32 to vector<1x8x128xf32>
    %c0_7 = arith.constant 0 : index
    %c0_8 = arith.constant 0 : index
    %c0_9 = arith.constant 0 : index
    %36 = vector.load %arg2[%c0_7, %c0_8, %c0_9] : memref<1x8x128xf32, #tpu.memory_space<vmem>>, vector<1x8x128xf32>
    tpu.vector_store %arg2[%c0_7, %c0_8, %c0_9], %35 {strides = array<i32>} : memref<1x8x128xf32, #tpu.memory_space<vmem>>, vector<1x8x128xf32>,
    %37 = arith.mulf %29, %29 : vector<8x256xf32>
    %38 = vector.shape_cast %37 : vector<8x256xf32> to vector<1x8x256xf32>
    %cst_10 = arith.constant dense<0.000000e+00> : vector<1xf32>
    %39 = vector.multi_reduction <add>, %38, %cst_10 [1, 2] : vector<1x8x256xf32> to vector<1xf32>
    %40 = vector.shape_cast %39 : vector<1xf32> to vector<1x1x1xf32>
    %41 = vector.extract %40[0, 0, 0] : f32 from vector<1x1x1xf32>
    %42 = vector.broadcast %41 : f32 to vector<1x8x128xf32>
    %c0_11 = arith.constant 0 : index
    %c0_12 = arith.constant 0 : index
    %c0_13 = arith.constant 0 : index
    %43 = vector.load %arg3[%c0_11, %c0_12, %c0_13] : memref<1x8x128xf32, #tpu.memory_space<vmem>>, vector<1x8x128xf32>
    tpu.vector_store %arg3[%c0_11, %c0_12, %c0_13], %42 {strides = array<i32>} : memref<1x8x128xf32, #tpu.memory_space<vmem>>, vector<1x8x128xf32>,
    return
  }
  func.func @transform_0(%arg0: i32) -> (i32, i32) {
    %c0_i32 = arith.constant 0 : i32
    %c0_i32_0 = arith.constant 0 : i32
    return %arg0, %c0_i32 : i32, i32
  }
  func.func @transform_1(%arg0: i32) -> (i32, i32, i32) {
    %c0_i32 = arith.constant 0 : i32
    %c0_i32_0 = arith.constant 0 : i32
    %c0_i32_1 = arith.constant 0 : i32
    return %arg0, %c0_i32, %c0_i32_0 : i32, i32, i32
  }
  func.func @transform_2(%arg0: i32) -> (i32, i32, i32) {
    %c0_i32 = arith.constant 0 : i32
    %c0_i32_0 = arith.constant 0 : i32
    %c0_i32_1 = arith.constant 0 : i32
    return %arg0, %c0_i32, %c0_i32_0 : i32, i32, i32
  }
}

</mosaic_0001>

<llo_original>
// kernel: tpu_custom_call.1
$region0: #{tpu_custom_call.1}
  #allocation0 [shape = 'u32[]', space=smem, size = 0x4, offset = 0x4, fixed_abs, tag = 'smem constant byte address 0x4 - core index']
  #allocation1 [shape = 'u32[144,128]{1,0:T(1,128)}', space=vmem, size = 0x12000, scoped, tag = 'internal scratch']
  %s0 = inlined_call_operand.hbm [shape: f32[8,256], index: 0, kind: input, shape index: {}]
  %s1 = inlined_call_operand.hbm [shape: f32[1,8,128], index: 1, kind: output, shape index: {0}]
  %s2 = inlined_call_operand.hbm [shape: f32[1,8,128], index: 2, kind: output, shape index: {1}]
  %3 = xla_tuple %s1, %s2
  %s4 = sld [smem:[#allocation0]]
  $region26: #{tpu_custom_call.1} parent=0
    _
  %s6 = ssub.s32 1, %s4
  %s7 = scalar_select 0, %s6, %s4
  $region1: #{tpu_custom_call.1} parent=0
    #allocation2 [shape = 'u8[8192]{0}', space=vmem, size = 0x2000, scoped, tag = 'input window, operand 0, single buffered']
    #allocation3 [shape = 's32[1]{0}', space=sflag, size = 0x4, scoped, tag = 'scoped memory for tpu_custom_call.1']
    #allocation4 [shape = 's32[1]{0}', space=sflag, size = 0x4, scoped, tag = 'scoped memory for tpu_custom_call.1']
    #allocation5 [shape = 'u8[4096]{0}', space=vmem, size = 0x1000, scoped, tag = 'output window, operand 0, single buffered']
    #allocation6 [shape = 'u8[4096]{0}', space=vmem, size = 0x1000, scoped, tag = 'output window, operand 1, single buffered']
    #allocation7 [shape = 's32[1]{0}', space=sflag, size = 0x4, scoped, tag = 'scoped memory for tpu_custom_call.1']
    %8 = vsyncpa [#allocation3], 0
    %9 = vsyncpa [#allocation4], 0
    %10 = vsyncpa [#allocation7], 0
    // Predicated region
    $region2: #{tpu_custom_call.1} parent=1 // pred_check
      _
    $region3: #{tpu_custom_call.1} parent=1 // pred_check_branch
      %12 = sbr.rel (0) target = $region5
    $region4: #{tpu_custom_call.1} parent=1 // pred_region
      %s14 = ssub.s32 256, 256
      %15 = vsyncadd [#allocation3], %s14
      %s17 = sshll.u32 [#allocation2], 4
      %s18 = int_to_ptr.vmem [resolvable:$true] %s17
      %20 = dma.hbm_to_vmem [thread:$0]  %s0, 256, %s18, [#allocation3]
    $region5: #{tpu_custom_call.1} parent=1 // pred_fallthru
      _
    // Predicated region
    $region6: #{tpu_custom_call.1} parent=1 // pred_check
      _
    $region7: #{tpu_custom_call.1} parent=1 // pred_check_branch
      %22 = sbr.rel (0) target = $region9
    $region8: #{tpu_custom_call.1} parent=1 // pred_region
      %23 = dma.done [#allocation3], 256
    $region9: #{tpu_custom_call.1} parent=1 // pred_fallthru
      _
    %v24 = vld [vmem:[#allocation2] sm:$0xff]
    %v25 = vld [vmem:[#allocation2 + $0x8] sm:$0xff]
    %v26 = vlaneseq
    %v27 = vand.u32 %v26, 127
    %v28 = vadd.s32 %v27, 128
    %29 = vrot.lane.b32.xlu0 %v24, 112
    %v30 = vpop.permute.xlu0 %29
    %31 = vrot.lane.b32.xlu0 %v25, 112
    %v32 = vpop.permute.xlu0 %31
    %vm33 = vcmp.lt.s32.totalorder %v27, 112
    %v34 = vsel %vm33, %v30, %v32
    %v35 = vsel %vm33, %v32, %v30
    %vm36 = vcmp.lt.s32.totalorder %v27, 240
    %vm37 = vcmp.lt.s32.totalorder %v28, 240
    %v38 = vsub.f32 %v34, %v24
    %v39 = vsub.f32 %v35, %v25
    %v40 = vsel %vm36, %v38, 0.0
    %v41 = vsel %vm37, %v39, 0.0
    %42 = vrot.lane.b32.xlu0 %v24, 127
    %v43 = vpop.permute.xlu0 %42
    %44 = vrot.lane.b32.xlu0 %v25, 127
    %v45 = vpop.permute.xlu0 %44
    %vm46 = vcmp.lt.s32.totalorder %v27, 127
    %v47 = vsel %vm46, %v43, %v45
    %v48 = vsel %vm46, %v45, %v43
    %vm49 = vcmp.lt.s32.totalorder %v27, 0
    %v50 = vsub.s32 0, %v27
    %v51 = vsel %vm49, %v50, %v27
    %v52 = vshrl.u32 %v51, 4
    %v53 = vand.u32 %v51, 15
    %v54 = vsub.s32 0, %v53
    %v55 = vsel %vm49, %v54, %v53
    %vm56 = vcmp.lt.s32.totalorder %v28, 0
    %v57 = vsub.s32 0, %v28
    %v58 = vsel %vm56, %v57, %v28
    %v59 = vshrl.u32 %v58, 4
    %v60 = vand.u32 %v58, 15
    %v61 = vsub.s32 0, %v60
    %v62 = vsel %vm56, %v61, %v60
    %vm63 = vcmp.ne.s32.totalorder %v55, 0
    %vm64 = vcmp.ne.s32.totalorder %v62, 0
    %vm65 = vcmp.lt.s32.totalorder %v55, 0
    %vm66 = vcmp.lt.s32.totalorder %v62, 0
    %vm67 = vmand %vm65, %vm63
    %vm68 = vmand %vm66, %vm64
    %v69 = vadd.s32 %v55, 16
    %v70 = vadd.s32 %v62, 16
    %v71 = vsel %vm67, %v69, %v55
    %v72 = vsel %vm68, %v70, %v62
    %vm73 = vcmp.ne.s32.totalorder %v71, 15
    %vm74 = vcmp.ne.s32.totalorder %v72, 15
    %v75 = vsub.f32 %v47, %v24
    %v76 = vsub.f32 %v48, %v25
    %v77 = vsel %vm73, %v75, 0.0
    %v78 = vsel %vm74, %v76, 0.0
    %v79 = vmul.f32 %v40, %v40
    %v80 = vmul.f32 %v41, %v41
    %v81 = vadd.f32 %v79, %v80
    %82 = vadd.xlane.f32.xlu0 %v81
    %v83 = vpop.xlane.xlu0 %82
    %v84 = vrot.slane %v83, 4
    %v85 = vadd.f32 %v83, %v84
    %v86 = vrot.slane %v85, 2
    %v87 = vadd.f32 %v85, %v86
    %v88 = vrot.slane %v87, 1
    %v89 = vadd.f32 %v87, %v88
    %s90 = vtos %v89
    %v91 = vstv %s90
    %92 = vst [vmem:[#allocation5] sm:$0xff] %v91
    %v93 = vmul.f32 %v77, %v77
    %v94 = vmul.f32 %v78, %v78
    %v95 = vadd.f32 %v93, %v94
    %96 = vadd.xlane.f32.xlu0 %v95
    %v97 = vpop.xlane.xlu0 %96
    %v98 = vrot.slane %v97, 4
    %v99 = vadd.f32 %v97, %v98
    %v100 = vrot.slane %v99, 2
    %v101 = vadd.f32 %v99, %v100
    %v102 = vrot.slane %v101, 1
    %v103 = vadd.f32 %v101, %v102
    %s104 = vtos %v103
    %v105 = vstv %s104
    %106 = vst [vmem:[#allocation6] sm:$0xff] %v105
    // Predicated region
    $region10: #{tpu_custom_call.1} parent=1 // pred_check
      _
    $region11: #{tpu_custom_call.1} parent=1 // pred_check_branch
      %108 = sbr.rel (0) target = $region13
    $region12: #{tpu_custom_call.1} parent=1 // pred_region
      %s110 = ssub.s32 128, 128
      %111 = vsyncadd [#allocation4], %s110
      %s113 = sshll.u32 [#allocation5], 4
      %s114 = int_to_ptr.vmem [resolvable:$true] %s113
      %116 = dma.vmem_to_hbm [thread:$0]  %s114, 128, %s1, [#allocation4]
    $region13: #{tpu_custom_call.1} parent=1 // pred_fallthru
      _
    // Predicated region
    $region14: #{tpu_custom_call.1} parent=1 // pred_check
      _
    $region15: #{tpu_custom_call.1} parent=1 // pred_check_branch
      %118 = sbr.rel (0) target = $region17
    $region16: #{tpu_custom_call.1} parent=1 // pred_region
      %s120 = ssub.s32 128, 128
      %121 = vsyncadd [#allocation7], %s120
      %s123 = sshll.u32 [#allocation6], 4
      %s124 = int_to_ptr.vmem [resolvable:$true] %s123
      %126 = dma.vmem_to_hbm [thread:$0]  %s124, 128, %s2, [#allocation7]
    $region17: #{tpu_custom_call.1} parent=1 // pred_fallthru
      _
    // Predicated region
    $region18: #{tpu_custom_call.1} parent=1 // pred_check
      _
    $region19: #{tpu_custom_call.1} parent=1 // pred_check_branch
      %128 = sbr.rel (0) target = $region21
    $region20: #{tpu_custom_call.1} parent=1 // pred_region
      %129 = dma.done [#allocation4], 128
    $region21: #{tpu_custom_call.1} parent=1 // pred_fallthru
      _
    // Predicated region
    $region22: #{tpu_custom_call.1} parent=1 // pred_check
      _
    $region23: #{tpu_custom_call.1} parent=1 // pred_check_branch
      %131 = sbr.rel (0) target = $region25
    $region24: #{tpu_custom_call.1} parent=1 // pred_region
      %132 = dma.done [#allocation7], 128
    $region25: #{tpu_custom_call.1} parent=1 // pred_fallthru
      _
    %133 = vsyncpa [#allocation3], 1
    %134 = vsyncpa [#allocation4], 1
    %135 = vsyncpa [#allocation7], 1

</llo_original>
